<compile_context>
chip_gen: v7x
topology: tpu7x:2x2x1
jax: 0.10.0
libtpu: 0.0.40
codegen_flags: <defaults>
</compile_context>

<pallas_src>
from functools import partial

import jax
import jax.numpy as jnp
from jax.experimental import pallas as pl
from jax.experimental.pallas import tpu as pltpu


def ffn_kernel(x_ref, w1_ref, b1_ref, w2_ref, b2_ref, out_ref, acc_ref):
    """One (M-tile, H-chunk) grid step of y = relu(x@W1+b1) @ W2 + b2."""
    j = pl.program_id(1)

    # Initialize the resident accumulator with the output bias on the first
    # H-chunk of every M-tile.
    @pl.when(j == 0)
    def _():
        acc_ref[...] = jnp.broadcast_to(
            b2_ref[...].astype(jnp.float32), acc_ref.shape
        )

    # hidden chunk: relu(x @ W1[:, chunk] + b1[chunk])   -> (tm, th) in f32
    h = jnp.dot(x_ref[...], w1_ref[...], preferred_element_type=jnp.float32)
    h = jnp.maximum(h + b1_ref[...].astype(jnp.float32), 0.0)

    # accumulate chunk's contribution to the output: h @ W2[chunk, :]
    acc_ref[...] += jnp.dot(
        h.astype(w2_ref.dtype), w2_ref[...], preferred_element_type=jnp.float32
    )

    # Write back once per M-tile, after the last H-chunk.
    @pl.when(j == pl.num_programs(1) - 1)
    def _():
        out_ref[...] = acc_ref[...].astype(out_ref.dtype)


def positionwise_feed_forward(x, w1, b1, w2, b2, *, block_m=256, block_h=512):
    """y = relu(x @ w1 + b1) @ w2 + b2, dropout = identity (eval mode).

    x:  [..., D]          (leading dims are flattened into the row axis M)
    w1: [D, H],  b1: [1, H]
    w2: [H, D],  b2: [1, D]
    """
    D = x.shape[-1]
    H = w1.shape[1]
    lead = x.shape[:-1]

    x2d = x.reshape(-1, D)
    M = x2d.shape[0]

    # ---- choose / pad the row (M) tile -------------------------------------
    if M <= block_m:
        tm, Mp = M, M                      # full-extent block (always legal)
    else:
        tm = block_m                       # multiple of 8 (sublane)
        Mp = pl.cdiv(M, tm) * tm
    if Mp != M:
        x2d = jnp.pad(x2d, ((0, Mp - M), (0, 0)))

    # ---- choose / pad the hidden (H) reduction chunk ------------------------
    if H <= block_h:
        th, Hp = H, H                      # full-extent block (always legal)
        w1p, b1p, w2p = w1, b1, w2
    else:
        th = block_h                       # multiple of 128 (lane)
        Hp = pl.cdiv(H, th) * th
        if Hp != H:                        # zero-padded units contribute 0
            w1p = jnp.pad(w1, ((0, 0), (0, Hp - H)))
            b1p = jnp.pad(b1, ((0, 0), (0, Hp - H)))
            w2p = jnp.pad(w2, ((0, Hp - H), (0, 0)))
        else:
            w1p, b1p, w2p = w1, b1, w2

    grid = (Mp // tm, Hp // th)

    # ---- VMEM budget hint (double-buffered inputs/outputs + f32 scratch) ----
    act_b = jnp.dtype(x.dtype).itemsize
    wgt_b = jnp.dtype(w1.dtype).itemsize
    est = (
        2 * (tm * D * act_b + D * th * wgt_b + th * wgt_b + th * D * wgt_b + D * wgt_b)
        + 2 * tm * D * act_b
        + tm * D * 4
    )
    vmem_limit = int(min(max(3 * est, 16 * 2**20), 48 * 2**20))

    out = pl.pallas_call(
        ffn_kernel,
        out_shape=jax.ShapeDtypeStruct((Mp, D), x.dtype),
        grid_spec=pltpu.PrefetchScalarGridSpec(
            num_scalar_prefetch=0,
            grid=grid,
            in_specs=[
                pl.BlockSpec((tm, D), lambda i, j: (i, 0)),   # x rows
                pl.BlockSpec((D, th), lambda i, j: (0, j)),   # W1 column chunk
                pl.BlockSpec((1, th), lambda i, j: (0, j)),   # b1 chunk
                pl.BlockSpec((th, D), lambda i, j: (j, 0)),   # W2 row chunk
                pl.BlockSpec((1, D), lambda i, j: (0, 0)),    # b2 (constant)
            ],
            out_specs=pl.BlockSpec((tm, D), lambda i, j: (i, 0)),  # resident acc
            scratch_shapes=[pltpu.VMEM((tm, D), jnp.float32)],
        ),
        compiler_params=pltpu.CompilerParams(
            dimension_semantics=("parallel", "arbitrary"),
            vmem_limit_bytes=vmem_limit,
        ),
    )(x2d, w1p, b1p, w2p, b2p := b2)

    return out[:M].reshape(*lead, D)


def reference_ffn(x, w1, b1, w2, b2):
    """Pure-JAX reference mirroring the PyTorch forward (eval mode)."""
    h = jax.nn.relu(x @ w1 + b1)
    return h @ w2 + b2


if __name__ == "__main__":
    B, S, D, H = 2, 8, 32, 64

    key = jax.random.PRNGKey(0)
    kx, k1, k2, k3, k4 = jax.random.split(key, 5)
    x = jax.random.normal(kx, (B, S, D), jnp.float32)
    w1 = jax.random.normal(k1, (D, H), jnp.float32) * 0.1
    b1 = jax.random.normal(k2, (1, H), jnp.float32) * 0.1
    w2 = jax.random.normal(k3, (H, D), jnp.float32) * 0.1
    b2 = jax.random.normal(k4, (1, D), jnp.float32) * 0.1

    out = positionwise_feed_forward(x, w1, b1, w2, b2)
    out = jax.block_until_ready(out)

    ref = reference_ffn(x, w1, b1, w2, b2)
    assert out.shape == ref.shape
    assert jnp.allclose(out, ref, atol=1e-4, rtol=1e-4), float(
        jnp.max(jnp.abs(out - ref))
    )

    # Exercise the tiled-M path (grid of 2 M-tiles) on the same data.
    out_tiled = jax.block_until_ready(
        positionwise_feed_forward(x, w1, b1, w2, b2, block_m=8)
    )
    assert jnp.allclose(out_tiled, ref, atol=1e-4, rtol=1e-4)

    print("KERNEL_OK")
</pallas_src>

<mosaic_0001>
module attributes {stable_mosaic.version = 11 : i64} {
  func.func @ffn_kernel(%arg0: i32, %arg1: i32, %arg2: memref<16x32xf32, #tpu.memory_space<vmem>>, %arg3: memref<32x64xf32, #tpu.memory_space<vmem>>, %arg4: memref<1x64xf32, #tpu.memory_space<vmem>>, %arg5: memref<64x32xf32, #tpu.memory_space<vmem>>, %arg6: memref<1x32xf32, #tpu.memory_space<vmem>>, %arg7: memref<16x32xf32, #tpu.memory_space<vmem>>, %arg8: memref<16x32xf32, #tpu.memory_space<vmem>>) attributes {dimension_semantics = [#tpu.dimension_semantics<parallel>, #tpu.dimension_semantics<arbitrary>], iteration_bounds = array<i64: 1, 1>, scalar_prefetch = 0 : i64, scratch_operands = 1 : i64, tpu.core_type = #tpu.core_type<tc>, window_params = [{transform_indices = @transform_0, window_bounds = array<i64: 16, 32>}, {transform_indices = @transform_1, window_bounds = array<i64: 32, 64>}, {transform_indices = @transform_2, window_bounds = array<i64: 1, 64>}, {transform_indices = @transform_3, window_bounds = array<i64: 64, 32>}, {pipeline_mode = #tpu.pipeline_mode<synchronous>, transform_indices = @transform_4, window_bounds = array<i64: 1, 32>}, {transform_indices = @transform_5, window_bounds = array<i64: 16, 32>}]} {
    %c0_i32 = arith.constant 0 : i32
    %0 = arith.cmpi eq, %arg1, %c0_i32 : i32
    %1 = arith.extui %0 : i1 to i32
    %c0_i32_0 = arith.constant 0 : i32
    %2 = arith.cmpi ne, %1, %c0_i32_0 : i32
    scf.if %2 {
      %c0_16 = arith.constant 0 : index
      %c0_17 = arith.constant 0 : index
      %19 = vector.load %arg6[%c0_16, %c0_17] : memref<1x32xf32, #tpu.memory_space<vmem>>, vector<1x32xf32>
      %20 = vector.shape_cast %19 : vector<1x32xf32> to vector<1x32xf32>
      %21 = vector.broadcast %20 : vector<1x32xf32> to vector<16x32xf32>
      %c0_18 = arith.constant 0 : index
      %c0_19 = arith.constant 0 : index
      %22 = vector.load %arg8[%c0_18, %c0_19] : memref<16x32xf32, #tpu.memory_space<vmem>>, vector<16x32xf32>
      tpu.vector_store %arg8[%c0_18, %c0_19], %21 {strides = array<i32>} : memref<16x32xf32, #tpu.memory_space<vmem>>, vector<16x32xf32>,
    } else {
    }
    %c0 = arith.constant 0 : index
    %c0_1 = arith.constant 0 : index
    %3 = vector.load %arg2[%c0, %c0_1] : memref<16x32xf32, #tpu.memory_space<vmem>>, vector<16x32xf32>
    %c0_2 = arith.constant 0 : index
    %c0_3 = arith.constant 0 : index
    %4 = vector.load %arg3[%c0_2, %c0_3] : memref<32x64xf32, #tpu.memory_space<vmem>>, vector<32x64xf32>
    %cst = arith.constant dense<0.000000e+00> : vector<16x64xf32>
    %5 = tpu.matmul %3, %4, %cst {dimension_numbers = #tpu.dot_dimension_numbers<[1], [0], [0], [1], [0, 0, 1, 1], [], []>} : vector<16x32xf32>, vector<32x64xf32>, vector<16x64xf32> -> vector<16x64xf32>
    %c0_4 = arith.constant 0 : index
    %c0_5 = arith.constant 0 : index
    %6 = vector.load %arg4[%c0_4, %c0_5] : memref<1x64xf32, #tpu.memory_space<vmem>>, vector<1x64xf32>
    %7 = vector.broadcast %6 : vector<1x64xf32> to vector<16x64xf32>
    %8 = arith.addf %5, %7 : vector<16x64xf32>
    %cst_6 = arith.constant 0.000000e+00 : f32
    %9 = vector.broadcast %cst_6 : f32 to vector<16x64xf32>
    %10 = arith.maximumf %8, %9 : vector<16x64xf32>
    %c0_7 = arith.constant 0 : index
    %c0_8 = arith.constant 0 : index
    %11 = vector.load %arg8[%c0_7, %c0_8] : memref<16x32xf32, #tpu.memory_space<vmem>>, vector<16x32xf32>
    %c0_9 = arith.constant 0 : index
    %c0_10 = arith.constant 0 : index
    %12 = vector.load %arg5[%c0_9, %c0_10] : memref<64x32xf32, #tpu.memory_space<vmem>>, vector<64x32xf32>
    %cst_11 = arith.constant dense<0.000000e+00> : vector<16x32xf32>
    %13 = tpu.matmul %10, %12, %cst_11 {dimension_numbers = #tpu.dot_dimension_numbers<[1], [0], [0], [1], [0, 0, 1, 1], [], []>} : vector<16x64xf32>, vector<64x32xf32>, vector<16x32xf32> -> vector<16x32xf32>
    %14 = arith.addf %11, %13 : vector<16x32xf32>
    %c0_12 = arith.constant 0 : index
    %c0_13 = arith.constant 0 : index
    %15 = vector.load %arg8[%c0_12, %c0_13] : memref<16x32xf32, #tpu.memory_space<vmem>>, vector<16x32xf32>
    tpu.vector_store %arg8[%c0_12, %c0_13], %14 {strides = array<i32>} : memref<16x32xf32, #tpu.memory_space<vmem>>, vector<16x32xf32>,
    %c0_i32_14 = arith.constant 0 : i32
    %16 = arith.cmpi eq, %arg1, %c0_i32_14 : i32
    %17 = arith.extui %16 : i1 to i32
    %c0_i32_15 = arith.constant 0 : i32
    %18 = arith.cmpi ne, %17, %c0_i32_15 : i32
    scf.if %18 {
      %c0_16 = arith.constant 0 : index
      %c0_17 = arith.constant 0 : index
      %19 = vector.load %arg8[%c0_16, %c0_17] : memref<16x32xf32, #tpu.memory_space<vmem>>, vector<16x32xf32>
      %c0_18 = arith.constant 0 : index
      %c0_19 = arith.constant 0 : index
      %20 = vector.load %arg7[%c0_18, %c0_19] : memref<16x32xf32, #tpu.memory_space<vmem>>, vector<16x32xf32>
      tpu.vector_store %arg7[%c0_18, %c0_19], %19 {strides = array<i32>} : memref<16x32xf32, #tpu.memory_space<vmem>>, vector<16x32xf32>,
    } else {
    }
    return
  }
  func.func @transform_0(%arg0: i32, %arg1: i32) -> (i32, i32) {
    %c0_i32 = arith.constant 0 : i32
    %c0_i32_0 = arith.constant 0 : i32
    return %arg0, %c0_i32 : i32, i32
  }
  func.func @transform_1(%arg0: i32, %arg1: i32) -> (i32, i32) {
    %c0_i32 = arith.constant 0 : i32
    %c0_i32_0 = arith.constant 0 : i32
    return %c0_i32, %arg1 : i32, i32
  }
  func.func @transform_2(%arg0: i32, %arg1: i32) -> (i32, i32) {
    %c0_i32 = arith.constant 0 : i32
    %c0_i32_0 = arith.constant 0 : i32
    return %c0_i32, %arg1 : i32, i32
  }
  func.func @transform_3(%arg0: i32, %arg1: i32) -> (i32, i32) {
    %c0_i32 = arith.constant 0 : i32
    %c0_i32_0 = arith.constant 0 : i32
    return %arg1, %c0_i32 : i32, i32
  }
  func.func @transform_4(%arg0: i32, %arg1: i32) -> (i32, i32) {
    %c0_i32 = arith.constant 0 : i32
    %c0_i32_0 = arith.constant 0 : i32
    %c0_i32_1 = arith.constant 0 : i32
    return %c0_i32, %c0_i32_0 : i32, i32
  }
  func.func @transform_5(%arg0: i32, %arg1: i32) -> (i32, i32) {
    %c0_i32 = arith.constant 0 : i32
    %c0_i32_0 = arith.constant 0 : i32
    return %arg0, %c0_i32 : i32, i32
  }
}

</mosaic_0001>

<llo_original>
// kernel: tpu_custom_call.1
$region0: #{tpu_custom_call.1}
  #allocation0 [shape = 'u32[]', space=smem, size = 0x4, offset = 0x4, fixed_abs, tag = 'smem constant byte address 0x4 - core index']
  #allocation1 [shape = 'u32[144,128]{1,0:T(1,128)}', space=vmem, size = 0x12000, scoped, tag = 'internal scratch']
  #allocation2 [shape = 'f32[16,32]{1,0:T(8,128)}', space=vmem, size = 0x2000, scoped, tag = 'scratch operand']
  %s0 = inlined_call_operand.vmem [shape: f32[16,32], index: 0, kind: input, shape index: {}]
  %s1 = inlined_call_operand.vmem [shape: f32[32,64], index: 1, kind: input, shape index: {}]
  %s2 = inlined_call_operand.vmem [shape: f32[1,64], index: 2, kind: input, shape index: {}]
  %s3 = inlined_call_operand.vmem [shape: f32[64,32], index: 3, kind: input, shape index: {}]
  %s4 = inlined_call_operand.vmem [shape: f32[1,32], index: 4, kind: input, shape index: {}]
  %s5 = inlined_call_operand.hbm [shape: f32[16,32], index: 5, kind: output, shape index: {}]
  %s6 = sld [smem:[#allocation0]]
  $region38: #{tpu_custom_call.1} parent=0
    _
  %s8 = ssub.s32 1, %s6
  %s9 = scalar_select 0, %s8, %s6
  $region1: #{tpu_custom_call.1} parent=0
    #allocation3 [shape = 'u8[8192]{0}', space=vmem, size = 0x2000, scoped, tag = 'output window, operand 0, single buffered']
    #allocation4 [shape = 's32[1]{0}', space=sflag, size = 0x4, scoped, tag = 'scoped memory for tpu_custom_call.1']
    %10 = vsyncpa [#allocation4], 0
    // Predicated region
    $region2: #{tpu_custom_call.1} parent=1 // pred_check
      _
    $region3: #{tpu_custom_call.1} parent=1 // pred_check_branch
      %12 = sbr.rel (0) target = $region5
    $region4: #{tpu_custom_call.1} parent=1 // pred_region
      _
    $region5: #{tpu_custom_call.1} parent=1 // pred_fallthru
      _
    // Predicated region
    $region6: #{tpu_custom_call.1} parent=1 // pred_check
      _
    $region7: #{tpu_custom_call.1} parent=1 // pred_check_branch
      %14 = sbr.rel (0) target = $region9
    $region8: #{tpu_custom_call.1} parent=1 // pred_region
      _
    $region9: #{tpu_custom_call.1} parent=1 // pred_fallthru
      _
    // Predicated region
    $region10: #{tpu_custom_call.1} parent=1 // pred_check
      _
    $region11: #{tpu_custom_call.1} parent=1 // pred_check_branch
      %16 = sbr.rel (0) target = $region13
    $region12: #{tpu_custom_call.1} parent=1 // pred_region
      _
    $region13: #{tpu_custom_call.1} parent=1 // pred_fallthru
      _
    // Predicated region
    $region14: #{tpu_custom_call.1} parent=1 // pred_check
      _
    $region15: #{tpu_custom_call.1} parent=1 // pred_check_branch
      %18 = sbr.rel (0) target = $region17
    $region16: #{tpu_custom_call.1} parent=1 // pred_region
      _
    $region17: #{tpu_custom_call.1} parent=1 // pred_fallthru
      _
    // Predicated region
    $region18: #{tpu_custom_call.1} parent=1 // pred_check
      _
    $region19: #{tpu_custom_call.1} parent=1 // pred_check_branch
      %20 = sbr.rel (0) target = $region21
    $region20: #{tpu_custom_call.1} parent=1 // pred_region
      _
    $region21: #{tpu_custom_call.1} parent=1 // pred_fallthru
      _
    %p21 = scmp.eq.s32.totalorder 0, 0
    // Predicated region
    $region22: #{tpu_custom_call.1} parent=1 // pred_check
      %p22 = pneg %p21
    $region23: #{tpu_custom_call.1} parent=1 // pred_check_branch
      %24 = sbr.rel (%p22) target = $region25
    $region24: #{tpu_custom_call.1} parent=1 // pred_region
      %v25 = vld [vmem:[%s4] sm:$0x1]
      %v27 = vlaneseq
      %v28 = vshrl.u32 %v27, 7
      %v29 = vsub.s32 0, %v28
      %v30 = vrot.slane %v25, %v29
      %vm32 = vcmask 261120
      %33 = vst.msk [vmem:[#allocation2] sm:$0xff] %vm32, %v30
      %34 = vst.msk [vmem:[#allocation2 + $0x8] sm:$0xff] %vm32, %v30
    $region25: #{tpu_custom_call.1} parent=1 // pred_fallthru
      _
    %v35 = vld [vmem:[%s0] sm:$0xff]
    %v36 = vld [vmem:[%s0 + $0x8] sm:$0xff]
    %v37 = vld [vmem:[%s1] sm:$0xff]
    %v38 = vld [vmem:[%s1 + $0x8] sm:$0xff]
    %v39 = vld [vmem:[%s1 + $0x10] sm:$0xff]
    %v40 = vld [vmem:[%s1 + $0x18] sm:$0xff]
    %v41 = vld [vmem:[%s2] sm:$0x1]
    %v43 = vlaneseq
    %v44 = vshrl.u32 %v43, 7
    %v45 = vsub.s32 0, %v44
    %v46 = vrot.slane %v41, %v45
    %vm48 = vcmask 261120
    %v50 = vsel %vm48, %v35, 0
    %v53 = vsel %vm48, %v36, 0
    %55 = vmatprep.subr.mxu0 0.0
    %56 = vmatpush1.msra.mxu0 %v37
    %57 = vmatprep.subr.mxu0 0.0
    %58 = vmatpush1.msra.mxu0 %v38
    %59 = vmatprep.subr.mxu0 0.0
    %60 = vmatpush1.msra.mxu0 %v39
    %61 = vmatprep.subr.mxu0 0.0
    %62 = vmatpush1.msra.mxu0 %v40
    %63 = vmatprep.subr.mxu0 0.0
    %64 = vmatpush1.msra.mxu0 0.0
    %65 = vmatprep.subr.mxu0 0.0
    %66 = vmatpush1.msra.mxu0 0.0
    %67 = vmatprep.subr.mxu0 0.0
    %68 = vmatpush1.msra.mxu0 0.0
    %69 = vmatprep.subr.mxu0 0.0
    %70 = vmatpush1.msra.mxu0 0.0
    %71 = vmatprep.subr.mxu0 0.0
    %72 = vmatpush1.msra.mxu0 0.0
    %73 = vmatprep.subr.mxu0 0.0
    %74 = vmatpush1.msra.mxu0 0.0
    %75 = vmatprep.subr.mxu0 0.0
    %76 = vmatpush1.msra.mxu0 0.0
    %77 = vmatprep.subr.mxu0 0.0
    %78 = vmatpush1.msra.mxu0 0.0
    %79 = vmatprep.subr.mxu0 0.0
    %80 = vmatpush1.msra.mxu0 0.0
    %81 = vmatprep.subr.mxu0 0.0
    %82 = vmatpush1.msra.mxu0 0.0
    %83 = vmatprep.subr.mxu0 0.0
    %84 = vmatpush1.msra.mxu0 0.0
    %85 = vmatprep.subr.mxu0 0.0
    %86 = vmatpush1.msra.mxu0 0.0
    %87 = vmatprep.subr.mxu0 0.0
    %88 = vmatpush1.msra.mxu0 0.0
    %89 = vmatprep.subr.mxu0 0.0
    %90 = vmatpush1.msra.mxu0 0.0
    %91 = vmatprep.subr.mxu0 0.0
    %92 = vmatpush1.msra.mxu0 0.0
    %93 = vmatprep.subr.mxu0 0.0
    %94 = vmatpush1.msra.mxu0 0.0
    %95 = vmatprep.subr.mxu0 0.0
    %96 = vmatpush1.msra.mxu0 0.0
    %97 = vmatprep.subr.mxu0 0.0
    %98 = vmatpush1.msra.mxu0 0.0
    %99 = vmatprep.subr.mxu0 0.0
    %100 = vmatpush1.msra.mxu0 0.0
    %101 = vmatprep.subr.mxu0 0.0
    %102 = vmatpush1.msra.mxu0 0.0
    %103 = vmatprep.subr.mxu0 0.0
    %104 = vmatpush1.msra.mxu0 0.0
    %105 = vmatprep.subr.mxu0 0.0
    %106 = vmatpush1.msra.mxu0 0.0
    %107 = vmatprep.subr.mxu0 0.0
    %108 = vmatpush1.msra.mxu0 0.0
    %109 = vmatprep.subr.mxu0 0.0
    %110 = vmatpush1.msra.mxu0 0.0
    %111 = vmatprep.subr.mxu0 0.0
    %112 = vmatpush1.msra.mxu0 0.0
    %113 = vmatprep.subr.mxu0 0.0
    %114 = vmatpush1.msra.mxu0 0.0
    %115 = vmatprep.subr.mxu0 0.0
    %116 = vmatpush1.msra.mxu0 0.0
    %117 = vmatprep.subr.mxu0 0.0
    %118 = vmatpush1.msra.mxu0 0.0
    %119 = vmatprep.mubr.f32.mxu0 0.0
    %120 = vmatmul.mubr.f32.gmra.mrb[0].mxu0 %v50
    %v121 = vpop.f32.mrb[0].mxu0
    %v122 = vadd.f32 %v46, %v121
    %v123 = vpop.f32.mrb[0].mxu0
    %124 = vmatprep.mubr.f32.mxu0 0.0
    %125 = vmatmul.mubr.f32.gmra.mrb[0].mxu0 %v53
    %v126 = vpop.f32.mrb[0].mxu0
    %v127 = vadd.f32 %v46, %v126
    %v128 = vpop.f32.mrb[0].mxu0
    %129 = vdwg.mxu0
    %v130 = vmax.f32 %v122, 0.0
    %v131 = vmax.f32 %v127, 0.0
    %v132 = vld [vmem:[#allocation2] sm:$0xff]
    %v133 = vld [vmem:[#allocation2 + $0x8] sm:$0xff]
    %v134 = vld [vmem:[%s3] sm:$0xff]
    %v135 = vld [vmem:[%s3 + $0x8] sm:$0xff]
    %v136 = vld [vmem:[%s3 + $0x10] sm:$0xff]
    %v137 = vld [vmem:[%s3 + $0x18] sm:$0xff]
    %v138 = vld [vmem:[%s3 + $0x20] sm:$0xff]
    %v139 = vld [vmem:[%s3 + $0x28] sm:$0xff]
    %v140 = vld [vmem:[%s3 + $0x30] sm:$0xff]
    %v141 = vld [vmem:[%s3 + $0x38] sm:$0xff]
    %vm142 = vcmask 523264
    %v144 = vsel %vm142, %v130, 0
    %v147 = vsel %vm142, %v131, 0
    %149 = vmatprep.subr.mxu0 0.0
    %150 = vmatpush1.msra.mxu0 %v134
    %151 = vmatprep.subr.mxu0 0.0
    %152 = vmatpush1.msra.mxu0 %v135
    %153 = vmatprep.subr.mxu0 0.0
    %154 = vmatpush1.msra.mxu0 %v136
    %155 = vmatprep.subr.mxu0 0.0
    %156 = vmatpush1.msra.mxu0 %v137
    %157 = vmatprep.subr.mxu0 0.0
    %158 = vmatpush1.msra.mxu0 %v138
    %159 = vmatprep.subr.mxu0 0.0
    %160 = vmatpush1.msra.mxu0 %v139
    %161 = vmatprep.subr.mxu0 0.0
    %162 = vmatpush1.msra.mxu0 %v140
    %163 = vmatprep.subr.mxu0 0.0
    %164 = vmatpush1.msra.mxu0 %v141
    %165 = vmatprep.subr.mxu0 0.0
    %166 = vmatpush1.msra.mxu0 0.0
    %167 = vmatprep.subr.mxu0 0.0
    %168 = vmatpush1.msra.mxu0 0.0
    %169 = vmatprep.subr.mxu0 0.0
    %170 = vmatpush1.msra.mxu0 0.0
    %171 = vmatprep.subr.mxu0 0.0
    %172 = vmatpush1.msra.mxu0 0.0
    %173 = vmatprep.subr.mxu0 0.0
    %174 = vmatpush1.msra.mxu0 0.0
    %175 = vmatprep.subr.mxu0 0.0
    %176 = vmatpush1.msra.mxu0 0.0
    %177 = vmatprep.subr.mxu0 0.0
    %178 = vmatpush1.msra.mxu0 0.0
    %179 = vmatprep.subr.mxu0 0.0
    %180 = vmatpush1.msra.mxu0 0.0
    %181 = vmatprep.subr.mxu0 0.0
    %182 = vmatpush1.msra.mxu0 0.0
    %183 = vmatprep.subr.mxu0 0.0
    %184 = vmatpush1.msra.mxu0 0.0
    %185 = vmatprep.subr.mxu0 0.0
    %186 = vmatpush1.msra.mxu0 0.0
    %187 = vmatprep.subr.mxu0 0.0
    %188 = vmatpush1.msra.mxu0 0.0
    %189 = vmatprep.subr.mxu0 0.0
    %190 = vmatpush1.msra.mxu0 0.0
    %191 = vmatprep.subr.mxu0 0.0
    %192 = vmatpush1.msra.mxu0 0.0
    %193 = vmatprep.subr.mxu0 0.0
    %194 = vmatpush1.msra.mxu0 0.0
    %195 = vmatprep.subr.mxu0 0.0
    %196 = vmatpush1.msra.mxu0 0.0
    %197 = vmatprep.subr.mxu0 0.0
    %198 = vmatpush1.msra.mxu0 0.0
    %199 = vmatprep.subr.mxu0 0.0
    %200 = vmatpush1.msra.mxu0 0.0
    %201 = vmatprep.subr.mxu0 0.0
    %202 = vmatpush1.msra.mxu0 0.0
    %203 = vmatprep.subr.mxu0 0.0
    %204 = vmatpush1.msra.mxu0 0.0
    %205 = vmatprep.subr.mxu0 0.0
    %206 = vmatpush1.msra.mxu0 0.0
    %207 = vmatprep.subr.mxu0 0.0
    %208 = vmatpush1.msra.mxu0 0.0
    %209 = vmatprep.subr.mxu0 0.0
    %210 = vmatpush1.msra.mxu0 0.0
    %211 = vmatprep.subr.mxu0 0.0
    %212 = vmatpush1.msra.mxu0 0.0
    %213 = vmatprep.mubr.f32.mxu0 0.0
    %214 = vmatmul.mubr.f32.gmra.mrb[0].mxu0 %v144
    %v215 = vpop.f32.mrb[0].mxu0
    %v216 = vadd.f32 0.0, %v215
    %v217 = vpop.f32.mrb[0].mxu0
    %218 = vmatprep.mubr.f32.mxu0 0.0
    %219 = vmatmul.mubr.f32.gmra.mrb[0].mxu0 %v147
    %v220 = vpop.f32.mrb[0].mxu0
    %v221 = vadd.f32 0.0, %v220
    %v222 = vpop.f32.mrb[0].mxu0
    %223 = vdwg.mxu0
    %v224 = vadd.f32 %v132, %v216
    %v225 = vadd.f32 %v133, %v221
    %226 = vst.msk [vmem:[#allocation2] sm:$0xff] %vm48, %v224
    %227 = vst.msk [vmem:[#allocation2 + $0x8] sm:$0xff] %vm48, %v225
    // Predicated region
    $region26: #{tpu_custom_call.1} parent=1 // pred_check
      %p228 = pneg %p21
    $region27: #{tpu_custom_call.1} parent=1 // pred_check_branch
      %230 = sbr.rel (%p228) target = $region29
    $region28: #{tpu_custom_call.1} parent=1 // pred_region
      %v231 = vld [vmem:[#allocation2] sm:$0xff]
      %v232 = vld [vmem:[#allocation2 + $0x8] sm:$0xff]
      %233 = vst.msk [vmem:[#allocation3] sm:$0xff] %vm48, %v231
      %234 = vst.msk [vmem:[#allocation3 + $0x8] sm:$0xff] %vm48, %v232
    $region29: #{tpu_custom_call.1} parent=1 // pred_fallthru
      _
    // Predicated region
    $region30: #{tpu_custom_call.1} parent=1 // pred_check
      _
    $region31: #{tpu_custom_call.1} parent=1 // pred_check_branch
      %236 = sbr.rel (0) target = $region33
    $region32: #{tpu_custom_call.1} parent=1 // pred_region
      %s238 = ssub.s32 256, 256
      %239 = vsyncadd [#allocation4], %s238
      %s240 = sshll.u32 [#allocation3], 4
      %s241 = int_to_ptr.vmem [resolvable:$true] %s240
      %246 = dma.vmem_to_hbm [thread:$0]  %s241, 256, %s5, [#allocation4], 128, 128, 8
    $region33: #{tpu_custom_call.1} parent=1 // pred_fallthru
      _
    // Predicated region
    $region34: #{tpu_custom_call.1} parent=1 // pred_check
      _
    $region35: #{tpu_custom_call.1} parent=1 // pred_check_branch
      %248 = sbr.rel (0) target = $region37
    $region36: #{tpu_custom_call.1} parent=1 // pred_region
      %249 = dma.done [#allocation4], 256
    $region37: #{tpu_custom_call.1} parent=1 // pred_fallthru
      _
    %250 = vsyncpa [#allocation4], 1

</llo_original>
